<compile_context>
chip_gen: v6e
topology: v6e:2x2x1
jax: 0.10.0
libtpu: 0.0.40
codegen_flags: <defaults>
</compile_context>

<pallas_src>
import functools

import jax
import jax.numpy as jnp
from jax import lax
from jax.experimental import pallas as pl
from jax.experimental.pallas import tpu as pltpu

LOG_STD_MIN = -20.0
LOG_STD_MAX = 2.0
INIT_W = 0.003

_MAX_TILE_B = 512  # rows per grid step; conservative for v7x's 64 MiB VMEM.


def _round_up(x, m):
    return ((x + m - 1) // m) * m


def _actor_kernel(x_ref, w1_ref, b1_ref, w2_ref, b2_ref, wh_ref, bh_ref,
                  out_ref, *, act_dim, log_std_min, log_std_max):
    # Hidden layer 1: bf16 MXU matmul, f32 accumulate, f32 bias + ReLU.
    h1 = jnp.dot(x_ref[...], w1_ref[...], preferred_element_type=jnp.float32)
    h1 = jnp.maximum(h1 + b1_ref[...], 0.0)

    # Hidden layer 2.
    h2 = jnp.dot(h1.astype(jnp.bfloat16), w2_ref[...],
                 preferred_element_type=jnp.float32)
    h2 = jnp.maximum(h2 + b2_ref[...], 0.0)

    # Fused heads: [TILE_B, 2*act_dim] = [mean | log_std].
    heads = jnp.dot(h2.astype(jnp.bfloat16), wh_ref[...],
                    preferred_element_type=jnp.float32) + bh_ref[...]

    # Clamp only the log_std columns (second half) with a cheap VPU select.
    col = lax.broadcasted_iota(jnp.int32, heads.shape, 1)
    clipped = jnp.clip(heads, log_std_min, log_std_max)
    out_ref[...] = jnp.where(col >= act_dim, clipped, heads)


def actor_forward(state, params,
                  log_std_min=LOG_STD_MIN, log_std_max=LOG_STD_MAX):
    """state: [B, obs_dim] float32.  Returns (mean, log_std), each [B, act_dim] f32."""
    w1, b1, w2, b2, wm, bm, ws, bs = params
    B, obs_dim = state.shape
    hidden_dim = w1.shape[1]
    act_dim = wm.shape[1]
    out2 = 2 * act_dim

    # Fuse the two heads into one lane-dense matmul / output block.
    wh = jnp.concatenate([wm, ws], axis=1)   # [H, 2*act_dim]
    bh = jnp.concatenate([bm, bs], axis=1)   # [1, 2*act_dim]

    # bf16 MXU operands; biases stay f32.
    x16 = state.astype(jnp.bfloat16)
    w1_16 = w1.astype(jnp.bfloat16)
    w2_16 = w2.astype(jnp.bfloat16)
    wh_16 = wh.astype(jnp.bfloat16)

    # Batch tiling: bound VMEM and double-buffer the activation/output tiles.
    tile_b = min(_MAX_TILE_B, _round_up(B, 8))
    padded_b = _round_up(B, tile_b)
    if padded_b != B:
        x16 = jnp.pad(x16, ((0, padded_b - B), (0, 0)))
    grid = (padded_b // tile_b,)

    kernel = functools.partial(
        _actor_kernel, act_dim=act_dim,
        log_std_min=float(log_std_min), log_std_max=float(log_std_max))

    flops = 2 * padded_b * (obs_dim * hidden_dim
                            + hidden_dim * hidden_dim
                            + hidden_dim * out2)
    bytes_accessed = (x16.size * 2
                      + (w1.size + w2.size + wh.size) * 2
                      + (b1.size + b2.size + bh.size) * 4
                      + padded_b * out2 * 4)

    # Explicit VMEM budget (v7x default scoped VMEM is 32 MiB of 64 MiB physical):
    # double-buffered tiles + resident weights + f32 intermediates, with 4x headroom.
    vmem_est = (2 * tile_b * obs_dim * 2                 # x tile (bf16, 2 bufs)
                + 2 * tile_b * out2 * 4                  # out tile (f32, 2 bufs)
                + (obs_dim * hidden_dim + hidden_dim * hidden_dim
                   + hidden_dim * out2) * 2 * 2          # weights (bf16, 2 bufs)
                + (2 * hidden_dim + out2) * 4 * 2        # biases
                + tile_b * (2 * hidden_dim + out2) * 4)  # f32 intermediates
    vmem_limit = min(64 * 1024 * 1024, max(32 * 1024 * 1024, 4 * vmem_est))

    heads = pl.pallas_call(
        kernel,
        out_shape=jax.ShapeDtypeStruct((padded_b, out2), jnp.float32),
        grid_spec=pltpu.PrefetchScalarGridSpec(
            num_scalar_prefetch=0,
            grid=grid,
            in_specs=[
                pl.BlockSpec((tile_b, obs_dim), lambda i: (i, 0)),       # state tile
                pl.BlockSpec((obs_dim, hidden_dim), lambda i: (0, 0)),   # W1 (resident)
                pl.BlockSpec((1, hidden_dim), lambda i: (0, 0)),         # b1
                pl.BlockSpec((hidden_dim, hidden_dim), lambda i: (0, 0)),# W2
                pl.BlockSpec((1, hidden_dim), lambda i: (0, 0)),         # b2
                pl.BlockSpec((hidden_dim, out2), lambda i: (0, 0)),      # W_heads
                pl.BlockSpec((1, out2), lambda i: (0, 0)),               # b_heads
            ],
            out_specs=pl.BlockSpec((tile_b, out2), lambda i: (i, 0)),
        ),
        compiler_params=pltpu.CompilerParams(
            dimension_semantics=("parallel",),
            vmem_limit_bytes=int(vmem_limit),
        ),
        cost_estimate=pl.CostEstimate(
            flops=flops, transcendentals=0, bytes_accessed=bytes_accessed),
    )(x16, w1_16, b1, w2_16, b2, wh_16, bh)

    heads = heads[:B]
    mean = heads[:, :act_dim]
    log_std = heads[:, act_dim:]
    return mean, log_std


def init_params(key, obs_dim, hidden_dim, act_dim):
    """Deterministic init mirroring the PyTorch module's __init__.

    l1 / l2 use PyTorch's default nn.Linear init: U(-1/sqrt(fan_in), 1/sqrt(fan_in)).
    mean_layer / log_std_layer use U(-init_w, init_w) for weights AND biases.
    Weights are stored [in, out]; biases stored [1, out] (2-D for TPU layout).
    """
    ks = jax.random.split(key, 8)

    def uniform(k, shape, bound):
        return jax.random.uniform(
            k, shape, dtype=jnp.float32, minval=-bound, maxval=bound)

    b1_bound = float(obs_dim) ** -0.5
    b2_bound = float(hidden_dim) ** -0.5

    w1 = uniform(ks[0], (obs_dim, hidden_dim), b1_bound)
    b1 = uniform(ks[1], (1, hidden_dim), b1_bound)
    w2 = uniform(ks[2], (hidden_dim, hidden_dim), b2_bound)
    b2 = uniform(ks[3], (1, hidden_dim), b2_bound)
    wm = uniform(ks[4], (hidden_dim, act_dim), INIT_W)
    bm = uniform(ks[5], (1, act_dim), INIT_W)
    ws = uniform(ks[6], (hidden_dim, act_dim), INIT_W)
    bs = uniform(ks[7], (1, act_dim), INIT_W)
    return (w1, b1, w2, b2, wm, bm, ws, bs)


def actor_forward_ref_f32(state, params,
                          log_std_min=LOG_STD_MIN, log_std_max=LOG_STD_MAX):
    """Pure-f32 JAX reference (module semantics)."""
    w1, b1, w2, b2, wm, bm, ws, bs = params
    a = jnp.maximum(state @ w1 + b1, 0.0)
    a = jnp.maximum(a @ w2 + b2, 0.0)
    mean = a @ wm + bm
    log_std = jnp.clip(a @ ws + bs, log_std_min, log_std_max)
    return mean, log_std


def actor_forward_ref_bf16(state, params,
                           log_std_min=LOG_STD_MIN, log_std_max=LOG_STD_MAX):
    """Reference that mimics the kernel numerics (bf16 matmul operands, f32 acc)."""
    w1, b1, w2, b2, wm, bm, ws, bs = params
    bf, f32 = jnp.bfloat16, jnp.float32
    a = jnp.maximum(jnp.dot(state.astype(bf), w1.astype(bf),
                            preferred_element_type=f32) + b1, 0.0)
    a = jnp.maximum(jnp.dot(a.astype(bf), w2.astype(bf),
                            preferred_element_type=f32) + b2, 0.0)
    a = a.astype(bf)
    mean = jnp.dot(a, wm.astype(bf), preferred_element_type=f32) + bm
    log_std = jnp.clip(jnp.dot(a, ws.astype(bf), preferred_element_type=f32) + bs,
                       log_std_min, log_std_max)
    return mean, log_std


if __name__ == "__main__":
    # Small shapes consistent with the module: flat observation -> MLP -> action heads.
    batch = 8
    obs_dim = 16      # np.prod(env.single_observation_space.shape)
    hidden_dim = 32
    act_dim = 4       # np.prod(env.action_space.shape)

    key = jax.random.PRNGKey(0)
    k_params, k_state = jax.random.split(key)

    params = init_params(k_params, obs_dim, hidden_dim, act_dim)
    state = jax.random.normal(k_state, (batch, obs_dim), dtype=jnp.float32)

    mean, log_std = actor_forward(state, params)
    jax.block_until_ready((mean, log_std))

    # Tight check against a reference with matching (bf16-operand) numerics.
    mean_b, log_std_b = actor_forward_ref_bf16(state, params)
    # Loose sanity check against the pure-f32 module semantics.
    mean_f, log_std_f = actor_forward_ref_f32(state, params)

    assert mean.shape == (batch, act_dim) and log_std.shape == (batch, act_dim)
    assert jnp.allclose(mean, mean_b, atol=1e-4, rtol=1e-4)
    assert jnp.allclose(log_std, log_std_b, atol=1e-4, rtol=1e-4)
    assert jnp.allclose(mean, mean_f, atol=5e-2, rtol=5e-2)
    assert jnp.allclose(log_std, log_std_f, atol=5e-2, rtol=5e-2)
    assert bool(jnp.all(log_std >= LOG_STD_MIN)) and bool(jnp.all(log_std <= LOG_STD_MAX))

    print("KERNEL_OK")
</pallas_src>

<mosaic_0001>
module attributes {stable_mosaic.version = 11 : i64} {
  func.func @_actor_kernel(%arg0: i32, %arg1: memref<8x16xbf16, #tpu.memory_space<vmem>>, %arg2: memref<16x32xbf16, #tpu.memory_space<vmem>>, %arg3: memref<1x32xf32, #tpu.memory_space<vmem>>, %arg4: memref<32x32xbf16, #tpu.memory_space<vmem>>, %arg5: memref<1x32xf32, #tpu.memory_space<vmem>>, %arg6: memref<32x8xbf16, #tpu.memory_space<vmem>>, %arg7: memref<1x8xf32, #tpu.memory_space<vmem>>, %arg8: memref<8x8xf32, #tpu.memory_space<vmem>>) attributes {dimension_semantics = [#tpu.dimension_semantics<parallel>], iteration_bounds = array<i64: 1>, scalar_prefetch = 0 : i64, scratch_operands = 0 : i64, tpu.core_type = #tpu.core_type<tc>, window_params = [{transform_indices = @transform_0, window_bounds = array<i64: 8, 16>}, {pipeline_mode = #tpu.pipeline_mode<synchronous>, transform_indices = @transform_1, window_bounds = array<i64: 16, 32>}, {pipeline_mode = #tpu.pipeline_mode<synchronous>, transform_indices = @transform_2, window_bounds = array<i64: 1, 32>}, {pipeline_mode = #tpu.pipeline_mode<synchronous>, transform_indices = @transform_3, window_bounds = array<i64: 32, 32>}, {pipeline_mode = #tpu.pipeline_mode<synchronous>, transform_indices = @transform_4, window_bounds = array<i64: 1, 32>}, {pipeline_mode = #tpu.pipeline_mode<synchronous>, transform_indices = @transform_5, window_bounds = array<i64: 32, 8>}, {pipeline_mode = #tpu.pipeline_mode<synchronous>, transform_indices = @transform_6, window_bounds = array<i64: 1, 8>}, {transform_indices = @transform_7, window_bounds = array<i64: 8, 8>}]} {
    %c0 = arith.constant 0 : index
    %c0_0 = arith.constant 0 : index
    %0 = vector.load %arg1[%c0, %c0_0] : memref<8x16xbf16, #tpu.memory_space<vmem>>, vector<8x16xbf16>
    %c0_1 = arith.constant 0 : index
    %c0_2 = arith.constant 0 : index
    %1 = vector.load %arg2[%c0_1, %c0_2] : memref<16x32xbf16, #tpu.memory_space<vmem>>, vector<16x32xbf16>
    %cst = arith.constant dense<0.000000e+00> : vector<8x32xf32>
    %2 = tpu.matmul %0, %1, %cst {dimension_numbers = #tpu.dot_dimension_numbers<[1], [0], [0], [1], [0, 0, 1, 1], [], []>} : vector<8x16xbf16>, vector<16x32xbf16>, vector<8x32xf32> -> vector<8x32xf32>
    %c0_3 = arith.constant 0 : index
    %c0_4 = arith.constant 0 : index
    %3 = vector.load %arg3[%c0_3, %c0_4] : memref<1x32xf32, #tpu.memory_space<vmem>>, vector<1x32xf32>
    %4 = vector.broadcast %3 : vector<1x32xf32> to vector<8x32xf32>
    %5 = arith.addf %2, %4 : vector<8x32xf32>
    %cst_5 = arith.constant 0.000000e+00 : f32
    %6 = vector.broadcast %cst_5 : f32 to vector<8x32xf32>
    %7 = arith.maximumf %5, %6 : vector<8x32xf32>
    %8 = arith.truncf %7 : vector<8x32xf32> to vector<8x32xbf16>
    %c0_6 = arith.constant 0 : index
    %c0_7 = arith.constant 0 : index
    %9 = vector.load %arg4[%c0_6, %c0_7] : memref<32x32xbf16, #tpu.memory_space<vmem>>, vector<32x32xbf16>
    %cst_8 = arith.constant dense<0.000000e+00> : vector<8x32xf32>
    %10 = tpu.matmul %8, %9, %cst_8 {dimension_numbers = #tpu.dot_dimension_numbers<[1], [0], [0], [1], [0, 0, 1, 1], [], []>} : vector<8x32xbf16>, vector<32x32xbf16>, vector<8x32xf32> -> vector<8x32xf32>
    %c0_9 = arith.constant 0 : index
    %c0_10 = arith.constant 0 : index
    %11 = vector.load %arg5[%c0_9, %c0_10] : memref<1x32xf32, #tpu.memory_space<vmem>>, vector<1x32xf32>
    %12 = vector.broadcast %11 : vector<1x32xf32> to vector<8x32xf32>
    %13 = arith.addf %10, %12 : vector<8x32xf32>
    %cst_11 = arith.constant 0.000000e+00 : f32
    %14 = vector.broadcast %cst_11 : f32 to vector<8x32xf32>
    %15 = arith.maximumf %13, %14 : vector<8x32xf32>
    %16 = arith.truncf %15 : vector<8x32xf32> to vector<8x32xbf16>
    %c0_12 = arith.constant 0 : index
    %c0_13 = arith.constant 0 : index
    %17 = vector.load %arg6[%c0_12, %c0_13] : memref<32x8xbf16, #tpu.memory_space<vmem>>, vector<32x8xbf16>
    %cst_14 = arith.constant dense<0.000000e+00> : vector<8x8xf32>
    %18 = tpu.matmul %16, %17, %cst_14 {dimension_numbers = #tpu.dot_dimension_numbers<[1], [0], [0], [1], [0, 0, 1, 1], [], []>} : vector<8x32xbf16>, vector<32x8xbf16>, vector<8x8xf32> -> vector<8x8xf32>
    %c0_15 = arith.constant 0 : index
    %c0_16 = arith.constant 0 : index
    %19 = vector.load %arg7[%c0_15, %c0_16] : memref<1x8xf32, #tpu.memory_space<vmem>>, vector<1x8xf32>
    %20 = vector.broadcast %19 : vector<1x8xf32> to vector<8x8xf32>
    %21 = arith.addf %18, %20 : vector<8x8xf32>
    %22 = tpu.iota {dimensions = array<i32: 1>} : vector<8x8xi32>
    %cst_17 = arith.constant -2.000000e+01 : f32
    %cst_18 = arith.constant 2.000000e+00 : f32
    %23 = vector.broadcast %cst_17 : f32 to vector<8x8xf32>
    %24 = arith.maximumf %23, %21 : vector<8x8xf32>
    %25 = vector.broadcast %cst_18 : f32 to vector<8x8xf32>
    %26 = arith.minimumf %25, %24 : vector<8x8xf32>
    %c4_i32 = arith.constant 4 : i32
    %27 = vector.broadcast %c4_i32 : i32 to vector<8x8xi32>
    %28 = arith.cmpi sge, %22, %27 : vector<8x8xi32>
    %29 = arith.select %28, %26, %21 : vector<8x8xi1>, vector<8x8xf32>
    %c0_19 = arith.constant 0 : index
    %c0_20 = arith.constant 0 : index
    %30 = vector.load %arg8[%c0_19, %c0_20] : memref<8x8xf32, #tpu.memory_space<vmem>>, vector<8x8xf32>
    tpu.vector_store %arg8[%c0_19, %c0_20], %29 {strides = array<i32>} : memref<8x8xf32, #tpu.memory_space<vmem>>, vector<8x8xf32>,
    return
  }
  func.func @transform_0(%arg0: i32) -> (i32, i32) {
    %c0_i32 = arith.constant 0 : i32
    %c0_i32_0 = arith.constant 0 : i32
    return %arg0, %c0_i32 : i32, i32
  }
  func.func @transform_1(%arg0: i32) -> (i32, i32) {
    %c0_i32 = arith.constant 0 : i32
    %c0_i32_0 = arith.constant 0 : i32
    %c0_i32_1 = arith.constant 0 : i32
    return %c0_i32, %c0_i32_0 : i32, i32
  }
  func.func @transform_2(%arg0: i32) -> (i32, i32) {
    %c0_i32 = arith.constant 0 : i32
    %c0_i32_0 = arith.constant 0 : i32
    %c0_i32_1 = arith.constant 0 : i32
    return %c0_i32, %c0_i32_0 : i32, i32
  }
  func.func @transform_3(%arg0: i32) -> (i32, i32) {
    %c0_i32 = arith.constant 0 : i32
    %c0_i32_0 = arith.constant 0 : i32
    %c0_i32_1 = arith.constant 0 : i32
    return %c0_i32, %c0_i32_0 : i32, i32
  }
  func.func @transform_4(%arg0: i32) -> (i32, i32) {
    %c0_i32 = arith.constant 0 : i32
    %c0_i32_0 = arith.constant 0 : i32
    %c0_i32_1 = arith.constant 0 : i32
    return %c0_i32, %c0_i32_0 : i32, i32
  }
  func.func @transform_5(%arg0: i32) -> (i32, i32) {
    %c0_i32 = arith.constant 0 : i32
    %c0_i32_0 = arith.constant 0 : i32
    %c0_i32_1 = arith.constant 0 : i32
    return %c0_i32, %c0_i32_0 : i32, i32
  }
  func.func @transform_6(%arg0: i32) -> (i32, i32) {
    %c0_i32 = arith.constant 0 : i32
    %c0_i32_0 = arith.constant 0 : i32
    %c0_i32_1 = arith.constant 0 : i32
    return %c0_i32, %c0_i32_0 : i32, i32
  }
  func.func @transform_7(%arg0: i32) -> (i32, i32) {
    %c0_i32 = arith.constant 0 : i32
    %c0_i32_0 = arith.constant 0 : i32
    return %arg0, %c0_i32 : i32, i32
  }
}

</mosaic_0001>

<llo_original>
// kernel: tpu_custom_call.1
$region0: #{tpu_custom_call.1}
  #allocation0 [shape = 'u32[]', space=smem, size = 0x4, offset = 0x4, fixed_abs, tag = 'smem constant byte address 0x4 - core index']
  #allocation1 [shape = 'u32[144,128]{1,0:T(1,128)}', space=vmem, size = 0x12000, scoped, tag = 'internal scratch']
  %s0 = inlined_call_operand.hbm [shape: bf16[8,16], index: 0, kind: input, shape index: {}]
  %s1 = inlined_call_operand.vmem [shape: bf16[16,32], index: 1, kind: input, shape index: {}]
  %s2 = inlined_call_operand.vmem [shape: f32[1,32], index: 2, kind: input, shape index: {}]
  %s3 = inlined_call_operand.vmem [shape: bf16[32,32], index: 3, kind: input, shape index: {}]
  %s4 = inlined_call_operand.hbm [shape: f32[1,32], index: 4, kind: input, shape index: {}]
  %s5 = inlined_call_operand.vmem [shape: bf16[32,8], index: 5, kind: input, shape index: {}]
  %s6 = inlined_call_operand.vmem [shape: f32[1,8], index: 6, kind: input, shape index: {}]
  %s7 = inlined_call_operand.hbm [shape: f32[8,8], index: 7, kind: output, shape index: {}]
  %s8 = sld [smem:[#allocation0]]
  $region46: #{tpu_custom_call.1} parent=0
    _
  %s10 = ssub.s32 1, %s8
  %s11 = scalar_select 0, %s10, %s8
  $region1: #{tpu_custom_call.1} parent=0
    #allocation2 [shape = 'u8[2048]{0}', space=vmem, size = 0x800, scoped, tag = 'input window, operand 0, single buffered']
    #allocation3 [shape = 's32[1]{0}', space=sflag, size = 0x4, scoped, tag = 'scoped memory for tpu_custom_call.1']
    #allocation4 [shape = 's32[1]{0}', space=sflag, size = 0x4, scoped, tag = 'scoped memory for tpu_custom_call.1']
    #allocation5 [shape = 'u8[512]{0}', space=vmem, size = 0x400, scoped, tag = 'input window, operand 4, single buffered']
    #allocation6 [shape = 's32[1]{0}', space=sflag, size = 0x4, scoped, tag = 'scoped memory for tpu_custom_call.1']
    #allocation7 [shape = 'u8[4096]{0}', space=vmem, size = 0x1000, scoped, tag = 'output window, operand 0, single buffered']
    %12 = vsyncpa [#allocation3], 0
    %13 = vsyncpa [#allocation6], 0
    %14 = vsyncpa [#allocation4], 0
    // Predicated region
    $region2: #{tpu_custom_call.1} parent=1 // pred_check
      _
    $region3: #{tpu_custom_call.1} parent=1 // pred_check_branch
      %16 = sbr.rel (0) target = $region5
    $region4: #{tpu_custom_call.1} parent=1 // pred_region
      %s18 = ssub.s32 64, 64
      %19 = vsyncadd [#allocation3], %s18
      %s21 = sshll.u32 [#allocation2], 4
      %s22 = int_to_ptr.vmem [resolvable:$true] %s21
      %24 = dma.hbm_to_vmem [thread:$0]  %s0, 64, %s22, [#allocation3]
    $region5: #{tpu_custom_call.1} parent=1 // pred_fallthru
      _
    // Predicated region
    $region6: #{tpu_custom_call.1} parent=1 // pred_check
      _
    $region7: #{tpu_custom_call.1} parent=1 // pred_check_branch
      %26 = sbr.rel (0) target = $region9
    $region8: #{tpu_custom_call.1} parent=1 // pred_region
      _
    $region9: #{tpu_custom_call.1} parent=1 // pred_fallthru
      _
    // Predicated region
    $region10: #{tpu_custom_call.1} parent=1 // pred_check
      _
    $region11: #{tpu_custom_call.1} parent=1 // pred_check_branch
      %28 = sbr.rel (0) target = $region13
    $region12: #{tpu_custom_call.1} parent=1 // pred_region
      _
    $region13: #{tpu_custom_call.1} parent=1 // pred_fallthru
      _
    // Predicated region
    $region14: #{tpu_custom_call.1} parent=1 // pred_check
      _
    $region15: #{tpu_custom_call.1} parent=1 // pred_check_branch
      %30 = sbr.rel (0) target = $region17
    $region16: #{tpu_custom_call.1} parent=1 // pred_region
      _
    $region17: #{tpu_custom_call.1} parent=1 // pred_fallthru
      _
    // Predicated region
    $region18: #{tpu_custom_call.1} parent=1 // pred_check
      _
    $region19: #{tpu_custom_call.1} parent=1 // pred_check_branch
      %32 = sbr.rel (0) target = $region21
    $region20: #{tpu_custom_call.1} parent=1 // pred_region
      %s34 = ssub.s32 16, 16
      %35 = vsyncadd [#allocation6], %s34
      %s37 = sshll.u32 [#allocation5], 4
      %s38 = int_to_ptr.vmem [resolvable:$true] %s37
      %40 = dma.hbm_to_vmem [thread:$0]  %s4, 16, %s38, [#allocation6]
    $region21: #{tpu_custom_call.1} parent=1 // pred_fallthru
      _
    // Predicated region
    $region22: #{tpu_custom_call.1} parent=1 // pred_check
      _
    $region23: #{tpu_custom_call.1} parent=1 // pred_check_branch
      %42 = sbr.rel (0) target = $region25
    $region24: #{tpu_custom_call.1} parent=1 // pred_region
      _
    $region25: #{tpu_custom_call.1} parent=1 // pred_fallthru
      _
    // Predicated region
    $region26: #{tpu_custom_call.1} parent=1 // pred_check
      _
    $region27: #{tpu_custom_call.1} parent=1 // pred_check_branch
      %44 = sbr.rel (0) target = $region29
    $region28: #{tpu_custom_call.1} parent=1 // pred_region
      _
    $region29: #{tpu_custom_call.1} parent=1 // pred_fallthru
      _
    // Predicated region
    $region30: #{tpu_custom_call.1} parent=1 // pred_check
      _
    $region31: #{tpu_custom_call.1} parent=1 // pred_check_branch
      %46 = sbr.rel (0) target = $region33
    $region32: #{tpu_custom_call.1} parent=1 // pred_region
      %47 = dma.done [#allocation3], 64
    $region33: #{tpu_custom_call.1} parent=1 // pred_fallthru
      _
    // Predicated region
    $region34: #{tpu_custom_call.1} parent=1 // pred_check
      _
    $region35: #{tpu_custom_call.1} parent=1 // pred_check_branch
      %49 = sbr.rel (0) target = $region37
    $region36: #{tpu_custom_call.1} parent=1 // pred_region
      %50 = dma.done [#allocation6], 16
    $region37: #{tpu_custom_call.1} parent=1 // pred_fallthru
      _
    %v52 = vld [vmem:[#allocation2] sm:$0xf]
    %v53 = vld [vmem:[%s1] sm:$0xf]
    %v54 = vld [vmem:[%s1 + $0x4] sm:$0xf]
    %v55 = vld [vmem:[%s2] sm:$0x1]
    %v57 = vlaneseq
    %v58 = vshrl.u32 %v57, 7
    %v59 = vsub.s32 0, %v58
    %v60 = vrot.slane %v55, %v59
    %v64 = vunpack.c.l.b16 %v53
    %v65 = vunpack.c.l.b16 %v54
    %v66 = vpack.c.b16 %v65, %v64
    %vm68 = vcmask 130048
    %v70 = vsel %vm68, %v52, 0
    %72 = vmatprep.subr.bf16.mxu0 0
    %73 = vmatpush1.bf16.msra.mxu0 0
    %74 = vmatprep.subr.bf16.mxu0 0
    %75 = vmatpush1.bf16.msra.mxu0 0
    %76 = vmatprep.subr.bf16.mxu0 0
    %77 = vmatpush1.bf16.msra.mxu0 0
    %78 = vmatprep.subr.bf16.mxu0 0
    %79 = vmatpush1.bf16.msra.mxu0 0
    %80 = vmatprep.subr.bf16.mxu0 0
    %81 = vmatpush1.bf16.msra.mxu0 0
    %82 = vmatprep.subr.bf16.mxu0 0
    %83 = vmatpush1.bf16.msra.mxu0 0
    %84 = vmatprep.subr.bf16.mxu0 0
    %85 = vmatpush1.bf16.msra.mxu0 0
    %86 = vmatprep.subr.bf16.mxu0 0
    %87 = vmatpush1.bf16.msra.mxu0 %v66
    %88 = vmatprep.subr.bf16.mxu0 0
    %89 = vmatpush2.bf16.msra.mxu0 0
    %90 = vmatprep.subr.bf16.mxu0 0
    %91 = vmatpush2.bf16.msra.mxu0 0
    %92 = vmatprep.subr.bf16.mxu0 0
    %93 = vmatpush2.bf16.msra.mxu0 0
    %94 = vmatprep.subr.bf16.mxu0 0
    %95 = vmatpush2.bf16.msra.mxu0 0
    %96 = vmatprep.subr.bf16.mxu0 0
    %97 = vmatpush2.bf16.msra.mxu0 0
    %98 = vmatprep.subr.bf16.mxu0 0
    %99 = vmatpush2.bf16.msra.mxu0 0
    %100 = vmatprep.subr.bf16.mxu0 0
    %101 = vmatpush2.bf16.msra.mxu0 0
    %102 = vmatprep.subr.bf16.mxu0 0
    %103 = vmatpush2.bf16.msra.mxu0 0
    %104 = vmatprep.mubr.bf16.mxu0 0
    %105 = vmatmul.mubr.bf16.gmra.mxu0 %v70
    %v106 = vpop.f32.mrf.mxu0
    %v107 = vadd.f32 %v60, %v106
    %v108 = vpop.f32.mrf.mxu0
    %v109 = vpop.f32.mrf.mxu0
    %v110 = vpop.f32.mrf.mxu0
    %111 = vdwg.mxu0
    %v112 = vmax.f32 %v107, 0.0
    %v113 = vpack.c.bf16 %v112, %v112
    %v114 = vld [vmem:[%s3] sm:$0xf]
    %v115 = vld [vmem:[%s3 + $0x4] sm:$0xf]
    %v116 = vld [vmem:[%s3 + $0x8] sm:$0xf]
    %v117 = vld [vmem:[%s3 + $0xc] sm:$0xf]
    %v118 = vld [vmem:[#allocation5] sm:$0x1]
    %v120 = vlaneseq
    %v121 = vshrl.u32 %v120, 7
    %v122 = vsub.s32 0, %v121
    %v123 = vrot.slane %v118, %v122
    %v129 = vunpack.c.l.b16 %v114
    %v130 = vunpack.c.l.b16 %v115
    %v131 = vunpack.c.l.b16 %v116
    %v132 = vunpack.c.l.b16 %v117
    %v133 = vpack.c.b16 %v130, %v129
    %v134 = vpack.c.b16 %v132, %v131
    %vm137 = vcmask 261120
    %v139 = vsel %vm137, %v113, 0
    %141 = vmatprep.subr.bf16.mxu0 0
    %142 = vmatpush1.bf16.msra.mxu0 0
    %143 = vmatprep.subr.bf16.mxu0 0
    %144 = vmatpush1.bf16.msra.mxu0 0
    %145 = vmatprep.subr.bf16.mxu0 0
    %146 = vmatpush1.bf16.msra.mxu0 0
    %147 = vmatprep.subr.bf16.mxu0 0
    %148 = vmatpush1.bf16.msra.mxu0 0
    %149 = vmatprep.subr.bf16.mxu0 0
    %150 = vmatpush1.bf16.msra.mxu0 0
    %151 = vmatprep.subr.bf16.mxu0 0
    %152 = vmatpush1.bf16.msra.mxu0 0
    %153 = vmatprep.subr.bf16.mxu0 0
    %154 = vmatpush1.bf16.msra.mxu0 %v134
    %155 = vmatprep.subr.bf16.mxu0 0
    %156 = vmatpush1.bf16.msra.mxu0 %v133
    %157 = vmatprep.subr.bf16.mxu0 0
    %158 = vmatpush2.bf16.msra.mxu0 0
    %159 = vmatprep.subr.bf16.mxu0 0
    %160 = vmatpush2.bf16.msra.mxu0 0
    %161 = vmatprep.subr.bf16.mxu0 0
    %162 = vmatpush2.bf16.msra.mxu0 0
    %163 = vmatprep.subr.bf16.mxu0 0
    %164 = vmatpush2.bf16.msra.mxu0 0
    %165 = vmatprep.subr.bf16.mxu0 0
    %166 = vmatpush2.bf16.msra.mxu0 0
    %167 = vmatprep.subr.bf16.mxu0 0
    %168 = vmatpush2.bf16.msra.mxu0 0
    %169 = vmatprep.subr.bf16.mxu0 0
    %170 = vmatpush2.bf16.msra.mxu0 0
    %171 = vmatprep.subr.bf16.mxu0 0
    %172 = vmatpush2.bf16.msra.mxu0 0
    %173 = vmatprep.mubr.bf16.mxu0 0
    %174 = vmatmul.mubr.bf16.gmra.mxu0 %v139
    %v175 = vpop.f32.mrf.mxu0
    %v176 = vadd.f32 %v123, %v175
    %v177 = vpop.f32.mrf.mxu0
    %v178 = vpop.f32.mrf.mxu0
    %v179 = vpop.f32.mrf.mxu0
    %180 = vdwg.mxu0
    %v181 = vmax.f32 %v176, 0.0
    %v182 = vpack.c.bf16 %v181, %v181
    %v183 = vld [vmem:[%s5] sm:$0xf]
    %v184 = vld [vmem:[%s5 + $0x4] sm:$0xf]
    %v185 = vld [vmem:[%s5 + $0x8] sm:$0xf]
    %v186 = vld [vmem:[%s5 + $0xc] sm:$0xf]
    %v187 = vld [vmem:[%s6] sm:$0x1]
    %v189 = vlaneseq
    %v190 = vshrl.u32 %v189, 7
    %v191 = vsub.s32 0, %v190
    %v192 = vrot.slane %v187, %v191
    %v198 = vunpack.c.l.b16 %v183
    %v199 = vunpack.c.l.b16 %v184
    %v200 = vunpack.c.l.b16 %v185
    %v201 = vunpack.c.l.b16 %v186
    %v202 = vpack.c.b16 %v199, %v198
    %v203 = vpack.c.b16 %v201, %v200
    %v207 = vsel %vm137, %v182, 0
    %209 = vmatprep.subr.bf16.mxu0 0
    %210 = vmatpush1.bf16.msra.mxu0 0
    %211 = vmatprep.subr.bf16.mxu0 0
    %212 = vmatpush1.bf16.msra.mxu0 0
    %213 = vmatprep.subr.bf16.mxu0 0
    %214 = vmatpush1.bf16.msra.mxu0 0
    %215 = vmatprep.subr.bf16.mxu0 0
    %216 = vmatpush1.bf16.msra.mxu0 0
    %217 = vmatprep.subr.bf16.mxu0 0
    %218 = vmatpush1.bf16.msra.mxu0 0
    %219 = vmatprep.subr.bf16.mxu0 0
    %220 = vmatpush1.bf16.msra.mxu0 0
    %221 = vmatprep.subr.bf16.mxu0 0
    %222 = vmatpush1.bf16.msra.mxu0 %v203
    %223 = vmatprep.subr.bf16.mxu0 0
    %224 = vmatpush1.bf16.msra.mxu0 %v202
    %225 = vmatprep.subr.bf16.mxu0 0
    %226 = vmatpush2.bf16.msra.mxu0 0
    %227 = vmatprep.subr.bf16.mxu0 0
    %228 = vmatpush2.bf16.msra.mxu0 0
    %229 = vmatprep.subr.bf16.mxu0 0
    %230 = vmatpush2.bf16.msra.mxu0 0
    %231 = vmatprep.subr.bf16.mxu0 0
    %232 = vmatpush2.bf16.msra.mxu0 0
    %233 = vmatprep.subr.bf16.mxu0 0
    %234 = vmatpush2.bf16.msra.mxu0 0
    %235 = vmatprep.subr.bf16.mxu0 0
    %236 = vmatpush2.bf16.msra.mxu0 0
    %237 = vmatprep.subr.bf16.mxu0 0
    %238 = vmatpush2.bf16.msra.mxu0 0
    %239 = vmatprep.subr.bf16.mxu0 0
    %240 = vmatpush2.bf16.msra.mxu0 0
    %241 = vmatprep.mubr.bf16.mxu0 0
    %242 = vmatmul.mubr.bf16.gmra.mxu0 %v207
    %v243 = vpop.f32.mrf.mxu0
    %v244 = vadd.f32 %v192, %v243
    %v245 = vpop.f32.mrf.mxu0
    %v246 = vpop.f32.mrf.mxu0
    %v247 = vpop.f32.mrf.mxu0
    %248 = vdwg.mxu0
    %v249 = vlaneseq
    %v250 = vand.u32 %v249, 127
    %v251 = vmax.f32 %v244, -20.0
    %v252 = vmin.f32 %v251, 2.0
    %vm253 = vcmp.ge.s32.totalorder %v250, 4
    %v254 = vsel %vm253, %v252, %v244
    %vm255 = vcmask 64512
    %256 = vst.msk [vmem:[#allocation7] sm:$0xff] %vm255, %v254
    // Predicated region
    $region38: #{tpu_custom_call.1} parent=1 // pred_check
      _
    $region39: #{tpu_custom_call.1} parent=1 // pred_check_branch
      %258 = sbr.rel (0) target = $region41
    $region40: #{tpu_custom_call.1} parent=1 // pred_region
      %s260 = ssub.s32 128, 128
      %261 = vsyncadd [#allocation4], %s260
      %s263 = sshll.u32 [#allocation7], 4
      %s264 = int_to_ptr.vmem [resolvable:$true] %s263
      %266 = dma.vmem_to_hbm [thread:$0]  %s264, 128, %s7, [#allocation4]
    $region41: #{tpu_custom_call.1} parent=1 // pred_fallthru
      _
    // Predicated region
    $region42: #{tpu_custom_call.1} parent=1 // pred_check
      _
    $region43: #{tpu_custom_call.1} parent=1 // pred_check_branch
      %268 = sbr.rel (0) target = $region45
    $region44: #{tpu_custom_call.1} parent=1 // pred_region
      %269 = dma.done [#allocation4], 128
    $region45: #{tpu_custom_call.1} parent=1 // pred_fallthru
      _
    %270 = vsyncpa [#allocation3], 1
    %271 = vsyncpa [#allocation6], 1
    %272 = vsyncpa [#allocation4], 1

</llo_original>
